<compile_context>
chip_gen: v7x
topology: tpu7x:2x2x1
jax: 0.10.0
libtpu: 0.0.40
codegen_flags: <defaults>
</compile_context>

<pallas_src>
import functools

import jax
import jax.numpy as jnp
from jax.experimental import pallas as pl
from jax.experimental.pallas import tpu as pltpu


def _round_up(x, m):
    return ((x + m - 1) // m) * m


def _vmem_limit_bytes():
    # Generation-aware scoped-VMEM cap: ~85% of physical per-TC VMEM
    # (v5e/v6e: 128 MiB -> ~109 MiB; v7x: 64 MiB -> ~54 MiB), leaving headroom
    # for compiler-internal scratch and the double-buffered stream tiles.
    try:
        cap = int(pltpu.get_tpu_info().vmem_capacity_bytes)
    except Exception:
        cap = 64 * 1024 * 1024
    return max(32 * 1024 * 1024, int(cap * 0.85))


def _pick_tm(n, tile_budget_bytes, row_bytes):
    """Row tile: as large as the VMEM budget allows (fewer grid steps, longer
    unmasked DMAs), rounded to 16 sublanes (bf16-friendly packing), with an
    even grid-step count when >1 so v7x's two TensorCores stay balanced."""
    tm_max = max(16, min(2048, (tile_budget_bytes // max(row_bytes, 1)) // 16 * 16))
    if n <= tm_max:
        if n > 256:
            return _round_up(pl.cdiv(n, 2), 16)   # >= 2 grid steps -> both TCs busy
        return max(16, _round_up(n, 16))
    tm = tm_max
    steps = pl.cdiv(n, tm)
    if steps > 1 and steps % 2 == 1:              # avoid e.g. a 2/1 TC split
        tm = max(16, _round_up(pl.cdiv(n, steps + 1), 16))
    return tm


def _srnn_kernel(step_ref,                                       # scalar prefetch (SMEM)
                 x_ref, wd_ref, bd_ref, wr_ref, br_ref, v_ref,   # inputs (VMEM)
                 spike_ref, v_out_ref,                           # outputs (VMEM)
                 *, decay, v_th, n_sub):
    # Fold the step==0 state reset into a scalar effective decay (no tile-wide
    # select / zeros broadcast; decay*v_prev computed exactly once).
    decay_eff = jnp.where(step_ref[0] > 0, jnp.float32(decay), jnp.float32(0.0))

    wd = wd_ref[...]
    bd = bd_ref[...]
    wr = wr_ref[...]
    br = br_ref[...]

    sub = x_ref.shape[0] // n_sub
    # Static unroll over sub-tiles: sub-tile A's recurrent matmul + VPU
    # threshold/cast can overlap sub-tile B's dense matmul on the MXU.
    for s in range(n_sub):
        rows = pl.ds(s * sub, sub)
        x_sub = x_ref[rows, :].astype(jnp.bfloat16)           # bf16 MXU feed, in-kernel cast
        y_dense = jnp.dot(x_sub, wd, preferred_element_type=jnp.float32) + bd

        # neuro.get_neuro_states(y_dense, step): peek LIF, do NOT persist state
        v_peek = decay_eff * v_ref[rows, :] + y_dense
        spike_pre = (v_peek > v_th).astype(jnp.bfloat16)       # {0,1} exact in bf16

        # recurrent(spike): y_rec = spike @ Wr + br
        y_rec = jnp.dot(spike_pre, wr, preferred_element_type=jnp.float32) + br

        # neuro(y_dense + y_rec, step): v_new = decay*v_prev + y = v_peek + y_rec
        v_new = v_peek + y_rec
        spike = v_new > v_th
        spike_ref[rows, :] = spike.astype(spike_ref.dtype)             # bf16 {0,1}
        v_out_ref[rows, :] = jnp.where(spike, jnp.float32(0.0), v_new)  # hard reset, f32


def srnn_forward(x, wd, bd, wr, br, v_prev, step, *, decay=0.5, v_th=0.5):
    """x: any leading shape logically ending in input_dim (reshaped to [-1, input_dim]).
    Returns (spike [n, out] bf16, new membrane state [n, out] f32)."""
    input_dim, output_dim = wd.shape
    x2 = jnp.reshape(x, (-1, input_dim))       # metadata-only; no HBM cast/pad copy of x
    n = x2.shape[0]

    # Lane-dense outputs: pad only the (small) weights/biases so the matmul N dim
    # and the spike / membrane stores are 128 multiples.  No-op when output_dim
    # already is (typical).  v_prev is only padded on this unaligned path.
    out_pad = _round_up(output_dim, 128)
    if out_pad != output_dim:
        pc = out_pad - output_dim
        wd = jnp.pad(wd, ((0, 0), (0, pc)))
        wr = jnp.pad(wr, ((0, pc), (0, pc)))
        bd = jnp.pad(jnp.reshape(bd, (1, -1)), ((0, 0), (0, pc)))
        br = jnp.pad(jnp.reshape(br, (1, -1)), ((0, 0), (0, pc)))
        v_prev = jnp.pad(v_prev, ((0, 0), (0, pc)))

    wd_bf = wd.astype(jnp.bfloat16)
    wr_bf = wr.astype(jnp.bfloat16)
    bd2 = jnp.reshape(bd, (1, out_pad)).astype(jnp.float32)
    br2 = jnp.reshape(br, (1, out_pad)).astype(jnp.float32)
    v_prev = v_prev.astype(jnp.float32)

    # VMEM budgeting: resident bf16 weights + double-buffered streamed tiles.
    vmem_limit = _vmem_limit_bytes()
    resident_bytes = (wd_bf.size + wr_bf.size) * 2 + (bd2.size + br2.size) * 4
    tile_budget = max(vmem_limit - resident_bytes - 8 * 1024 * 1024, 0)
    row_bytes = 2 * (input_dim * x2.dtype.itemsize + out_pad * (4 + 2 + 4))
    tm = _pick_tm(n, tile_budget, row_bytes)
    n_sub = 2 if tm >= 256 else 1              # sub-tile overlap only when worthwhile

    step_arr = jnp.reshape(jnp.asarray(step, dtype=jnp.int32), (1,))
    kernel = functools.partial(_srnn_kernel, decay=float(decay), v_th=float(v_th),
                               n_sub=n_sub)

    # Grid-invariant operands: constant index_map + single buffer (DMA'd once,
    # stays resident; no point double-buffering).
    def resident(shape):
        return pl.BlockSpec(shape, lambda i, step: (0, 0),
                            pipeline_mode=pl.Buffered(1))

    spike, v_new = pl.pallas_call(
        kernel,
        out_shape=(
            jax.ShapeDtypeStruct((n, out_pad), jnp.bfloat16),   # spikes ({0,1} exact)
            jax.ShapeDtypeStruct((n, out_pad), jnp.float32),    # membrane state
        ),
        grid_spec=pltpu.PrefetchScalarGridSpec(
            num_scalar_prefetch=1,
            grid=(pl.cdiv(n, tm),),                             # ragged last tile handled by Pallas
            in_specs=[
                pl.BlockSpec((tm, input_dim), lambda i, step: (i, 0)),   # x tile (native dtype)
                resident((input_dim, out_pad)),                          # Wd (bf16, resident)
                resident((1, out_pad)),                                  # bd
                resident((out_pad, out_pad)),                            # Wr (bf16, resident)
                resident((1, out_pad)),                                  # br
                pl.BlockSpec((tm, out_pad), lambda i, step: (i, 0)),     # v_prev tile
            ],
            out_specs=[
                pl.BlockSpec((tm, out_pad), lambda i, step: (i, 0)),     # spike out
                pl.BlockSpec((tm, out_pad), lambda i, step: (i, 0)),     # new membrane
            ],
        ),
        compiler_params=pltpu.CompilerParams(
            dimension_semantics=("parallel",),
            vmem_limit_bytes=int(vmem_limit),
        ),
    )(step_arr, x2, wd_bf, bd2, wr_bf, br2, v_prev)

    if out_pad != output_dim:
        spike = spike[:, :output_dim]
        v_new = v_new[:, :output_dim]
    return spike, v_new


def _reference(x, wd, bd, wr, br, v_prev, step, decay=0.5, v_th=0.5):
    """Pure-JAX reference with the same numerics (bf16 MXU feeds, f32 accumulate)."""
    input_dim = wd.shape[0]
    x2 = jnp.reshape(x, (-1, input_dim))
    xb = x2.astype(jnp.bfloat16)
    wdb = wd.astype(jnp.bfloat16)
    wrb = wr.astype(jnp.bfloat16)
    y_dense = jnp.dot(xb, wdb, preferred_element_type=jnp.float32) + bd
    decay_eff = jnp.where(step > 0, jnp.float32(decay), jnp.float32(0.0))
    v_peek = decay_eff * v_prev + y_dense
    spike_pre = (v_peek > v_th).astype(jnp.bfloat16)
    y_rec = jnp.dot(spike_pre, wrb, preferred_element_type=jnp.float32) + br
    v_new = v_peek + y_rec
    spike = (v_new > v_th).astype(jnp.float32)
    return spike, jnp.where(v_new > v_th, 0.0, v_new)


if __name__ == "__main__":
    input_dim, output_dim = 64, 128
    batch, seq = 2, 8                       # x reshaped to (-1, input_dim) -> 16 rows
    n_rows = batch * seq

    key = jax.random.PRNGKey(0)
    kx, kwd, kbd, kwr, kbr, kx2 = jax.random.split(key, 6)

    # deterministic "PyTorch-like" init: U(-1/sqrt(fan_in), 1/sqrt(fan_in))
    bd_bound = float(input_dim) ** -0.5
    br_bound = float(output_dim) ** -0.5
    wd = jax.random.uniform(kwd, (input_dim, output_dim), jnp.float32, -bd_bound, bd_bound)
    bd = jax.random.uniform(kbd, (1, output_dim), jnp.float32, -bd_bound, bd_bound)
    wr = jax.random.uniform(kwr, (output_dim, output_dim), jnp.float32, -br_bound, br_bound)
    br = jax.random.uniform(kbr, (1, output_dim), jnp.float32, -br_bound, br_bound)

    x = jax.random.normal(kx, (batch, seq, input_dim), jnp.float32)
    v0 = jnp.zeros((n_rows, output_dim), jnp.float32)

    # step 0 (state reset), then step 1 carrying the membrane state
    spike0, v1 = srnn_forward(x, wd, bd, wr, br, v0, step=0)
    spike1, v2 = srnn_forward(x, wd, bd, wr, br, v1, step=1)
    jax.block_until_ready((spike0, v1, spike1, v2))

    ref_s0, ref_v1 = _reference(x, wd, bd, wr, br, v0, 0)
    ref_s1, ref_v2 = _reference(x, wd, bd, wr, br, ref_v1, 1)

    assert jnp.allclose(spike0.astype(jnp.float32), ref_s0, atol=1e-5)
    assert jnp.allclose(v1, ref_v1, atol=1e-4)
    assert jnp.allclose(spike1.astype(jnp.float32), ref_s1, atol=1e-5)
    assert jnp.allclose(v2, ref_v2, atol=1e-4)

    # second shape: multi-step grid with a ragged last row-tile (padded reads /
    # masked writes path, no wrapper padding of x or v_prev)
    n2 = 300
    x_b = jax.random.normal(kx2, (n2, input_dim), jnp.float32)
    v0_b = jnp.zeros((n2, output_dim), jnp.float32)
    spike_b, v_b = srnn_forward(x_b, wd, bd, wr, br, v0_b, step=3)
    jax.block_until_ready((spike_b, v_b))
    ref_sb, ref_vb = _reference(x_b, wd, bd, wr, br, v0_b, 3)
    assert spike_b.shape == (n2, output_dim) and v_b.shape == (n2, output_dim)
    assert jnp.allclose(spike_b.astype(jnp.float32), ref_sb, atol=1e-5)
    assert jnp.allclose(v_b, ref_vb, atol=1e-4)

    print("KERNEL_OK")
</pallas_src>

<mosaic_0001>
module attributes {stable_mosaic.version = 11 : i64} {
  func.func @_srnn_kernel(%arg0: i32, %arg1: memref<1xi32, #tpu.memory_space<smem>>, %arg2: memref<16x64xf32, #tpu.memory_space<vmem>>, %arg3: memref<64x128xbf16, #tpu.memory_space<vmem>>, %arg4: memref<1x128xf32, #tpu.memory_space<vmem>>, %arg5: memref<128x128xbf16, #tpu.memory_space<vmem>>, %arg6: memref<1x128xf32, #tpu.memory_space<vmem>>, %arg7: memref<16x128xf32, #tpu.memory_space<vmem>>, %arg8: memref<16x128xbf16, #tpu.memory_space<vmem>>, %arg9: memref<16x128xf32, #tpu.memory_space<vmem>>) attributes {dimension_semantics = [#tpu.dimension_semantics<parallel>], iteration_bounds = array<i64: 1>, scalar_prefetch = 1 : i64, scratch_operands = 0 : i64, tpu.core_type = #tpu.core_type<tc>, window_params = [{transform_indices = @transform_0, window_bounds = array<i64: 16, 64>}, {pipeline_mode = #tpu.pipeline_mode<synchronous>, transform_indices = @transform_1, window_bounds = array<i64: 64, 128>}, {pipeline_mode = #tpu.pipeline_mode<synchronous>, transform_indices = @transform_2, window_bounds = array<i64: 1, 128>}, {pipeline_mode = #tpu.pipeline_mode<synchronous>, transform_indices = @transform_3, window_bounds = array<i64: 128, 128>}, {pipeline_mode = #tpu.pipeline_mode<synchronous>, transform_indices = @transform_4, window_bounds = array<i64: 1, 128>}, {transform_indices = @transform_5, window_bounds = array<i64: 16, 128>}, {transform_indices = @transform_6, window_bounds = array<i64: 16, 128>}, {transform_indices = @transform_7, window_bounds = array<i64: 16, 128>}]} {
    %c0 = arith.constant 0 : index
    %0 = memref.load %arg1[%c0] : memref<1xi32, #tpu.memory_space<smem>>
    %c0_i32 = arith.constant 0 : i32
    %1 = arith.cmpi sgt, %0, %c0_i32 : i32
    %cst = arith.constant 5.000000e-01 : f32
    %cst_0 = arith.constant 0.000000e+00 : f32
    %2 = arith.select %1, %cst, %cst_0 : f32
    %c0_1 = arith.constant 0 : index
    %c0_2 = arith.constant 0 : index
    %3 = vector.load %arg3[%c0_1, %c0_2] : memref<64x128xbf16, #tpu.memory_space<vmem>>, vector<64x128xbf16>
    %c0_3 = arith.constant 0 : index
    %c0_4 = arith.constant 0 : index
    %4 = vector.load %arg4[%c0_3, %c0_4] : memref<1x128xf32, #tpu.memory_space<vmem>>, vector<1x128xf32>
    %c0_5 = arith.constant 0 : index
    %c0_6 = arith.constant 0 : index
    %5 = vector.load %arg5[%c0_5, %c0_6] : memref<128x128xbf16, #tpu.memory_space<vmem>>, vector<128x128xbf16>
    %c0_7 = arith.constant 0 : index
    %c0_8 = arith.constant 0 : index
    %6 = vector.load %arg6[%c0_7, %c0_8] : memref<1x128xf32, #tpu.memory_space<vmem>>, vector<1x128xf32>
    %c0_9 = arith.constant 0 : index
    %c0_10 = arith.constant 0 : index
    %7 = vector.load %arg2[%c0_9, %c0_10] : memref<16x64xf32, #tpu.memory_space<vmem>>, vector<16x64xf32>
    %8 = arith.truncf %7 : vector<16x64xf32> to vector<16x64xbf16>
    %cst_11 = arith.constant dense<0.000000e+00> : vector<16x128xf32>
    %9 = tpu.matmul %8, %3, %cst_11 {dimension_numbers = #tpu.dot_dimension_numbers<[1], [0], [0], [1], [0, 0, 1, 1], [], []>} : vector<16x64xbf16>, vector<64x128xbf16>, vector<16x128xf32> -> vector<16x128xf32>
    %10 = vector.broadcast %4 : vector<1x128xf32> to vector<16x128xf32>
    %11 = arith.addf %9, %10 : vector<16x128xf32>
    %c0_12 = arith.constant 0 : index
    %c0_13 = arith.constant 0 : index
    %12 = vector.load %arg7[%c0_12, %c0_13] : memref<16x128xf32, #tpu.memory_space<vmem>>, vector<16x128xf32>
    %13 = vector.broadcast %2 : f32 to vector<16x128xf32>
    %14 = arith.mulf %13, %12 : vector<16x128xf32>
    %15 = arith.addf %14, %11 : vector<16x128xf32>
    %cst_14 = arith.constant 5.000000e-01 : f32
    %16 = vector.broadcast %cst_14 : f32 to vector<16x128xf32>
    %17 = arith.cmpf ogt, %15, %16 : vector<16x128xf32>
    %18 = arith.extui %17 : vector<16x128xi1> to vector<16x128xi32>
    %19 = arith.sitofp %18 : vector<16x128xi32> to vector<16x128xf32>
    %20 = arith.truncf %19 : vector<16x128xf32> to vector<16x128xbf16>
    %cst_15 = arith.constant dense<0.000000e+00> : vector<16x128xf32>
    %21 = tpu.matmul %20, %5, %cst_15 {dimension_numbers = #tpu.dot_dimension_numbers<[1], [0], [0], [1], [0, 0, 1, 1], [], []>} : vector<16x128xbf16>, vector<128x128xbf16>, vector<16x128xf32> -> vector<16x128xf32>
    %22 = vector.broadcast %6 : vector<1x128xf32> to vector<16x128xf32>
    %23 = arith.addf %21, %22 : vector<16x128xf32>
    %24 = arith.addf %15, %23 : vector<16x128xf32>
    %cst_16 = arith.constant 5.000000e-01 : f32
    %25 = vector.broadcast %cst_16 : f32 to vector<16x128xf32>
    %26 = arith.cmpf ogt, %24, %25 : vector<16x128xf32>
    %27 = arith.extui %26 : vector<16x128xi1> to vector<16x128xi32>
    %28 = arith.sitofp %27 : vector<16x128xi32> to vector<16x128xf32>
    %29 = arith.truncf %28 : vector<16x128xf32> to vector<16x128xbf16>
    %c0_17 = arith.constant 0 : index
    %c0_18 = arith.constant 0 : index
    %30 = vector.load %arg8[%c0_17, %c0_18] : memref<16x128xbf16, #tpu.memory_space<vmem>>, vector<16x128xbf16>
    tpu.vector_store %arg8[%c0_17, %c0_18], %29 {strides = array<i32>} : memref<16x128xbf16, #tpu.memory_space<vmem>>, vector<16x128xbf16>,
    %cst_19 = arith.constant 0.000000e+00 : f32
    %31 = vector.broadcast %cst_19 : f32 to vector<16x128xf32>
    %32 = arith.select %26, %31, %24 : vector<16x128xi1>, vector<16x128xf32>
    %c0_20 = arith.constant 0 : index
    %c0_21 = arith.constant 0 : index
    %33 = vector.load %arg9[%c0_20, %c0_21] : memref<16x128xf32, #tpu.memory_space<vmem>>, vector<16x128xf32>
    tpu.vector_store %arg9[%c0_20, %c0_21], %32 {strides = array<i32>} : memref<16x128xf32, #tpu.memory_space<vmem>>, vector<16x128xf32>,
    return
  }
  func.func @transform_0(%arg0: i32, %arg1: memref<1xi32, #tpu.memory_space<smem>>) -> (i32, i32) {
    %c0_i32 = arith.constant 0 : i32
    %c0_i32_0 = arith.constant 0 : i32
    return %arg0, %c0_i32 : i32, i32
  }
  func.func @transform_1(%arg0: i32, %arg1: memref<1xi32, #tpu.memory_space<smem>>) -> (i32, i32) {
    %c0_i32 = arith.constant 0 : i32
    %c0_i32_0 = arith.constant 0 : i32
    %c0_i32_1 = arith.constant 0 : i32
    return %c0_i32, %c0_i32_0 : i32, i32
  }
  func.func @transform_2(%arg0: i32, %arg1: memref<1xi32, #tpu.memory_space<smem>>) -> (i32, i32) {
    %c0_i32 = arith.constant 0 : i32
    %c0_i32_0 = arith.constant 0 : i32
    %c0_i32_1 = arith.constant 0 : i32
    return %c0_i32, %c0_i32_0 : i32, i32
  }
  func.func @transform_3(%arg0: i32, %arg1: memref<1xi32, #tpu.memory_space<smem>>) -> (i32, i32) {
    %c0_i32 = arith.constant 0 : i32
    %c0_i32_0 = arith.constant 0 : i32
    %c0_i32_1 = arith.constant 0 : i32
    return %c0_i32, %c0_i32_0 : i32, i32
  }
  func.func @transform_4(%arg0: i32, %arg1: memref<1xi32, #tpu.memory_space<smem>>) -> (i32, i32) {
    %c0_i32 = arith.constant 0 : i32
    %c0_i32_0 = arith.constant 0 : i32
    %c0_i32_1 = arith.constant 0 : i32
    return %c0_i32, %c0_i32_0 : i32, i32
  }
  func.func @transform_5(%arg0: i32, %arg1: memref<1xi32, #tpu.memory_space<smem>>) -> (i32, i32) {
    %c0_i32 = arith.constant 0 : i32
    %c0_i32_0 = arith.constant 0 : i32
    return %arg0, %c0_i32 : i32, i32
  }
  func.func @transform_6(%arg0: i32, %arg1: memref<1xi32, #tpu.memory_space<smem>>) -> (i32, i32) {
    %c0_i32 = arith.constant 0 : i32
    %c0_i32_0 = arith.constant 0 : i32
    return %arg0, %c0_i32 : i32, i32
  }
  func.func @transform_7(%arg0: i32, %arg1: memref<1xi32, #tpu.memory_space<smem>>) -> (i32, i32) {
    %c0_i32 = arith.constant 0 : i32
    %c0_i32_0 = arith.constant 0 : i32
    return %arg0, %c0_i32 : i32, i32
  }
}

</mosaic_0001>

<llo_original>
// kernel: tpu_custom_call.1
$region0: #{tpu_custom_call.1}
  #allocation0 [shape = 'u32[]', space=smem, size = 0x4, offset = 0x4, fixed_abs, tag = 'smem constant byte address 0x4 - core index']
  #allocation1 [shape = 'u32[144,128]{1,0:T(1,128)}', space=vmem, size = 0x12000, scoped, tag = 'internal scratch']
  #allocation2 [shape = 's32[1]{0}', space=sflag, size = 0x4, scoped, tag = 'scoped memory for tpu_custom_call.1']
  #allocation3 [shape = 's32[1]{0:T(128)S(6)}', space=smem, size = 0x200, scoped, tag = 'prefetched SMEM operand 0']
  %s0 = inlined_call_operand.<no memory space> [shape: s32[1], index: 0, kind: input, shape index: {}]
  %s1 = inlined_call_operand.hbm [shape: f32[16,64], index: 1, kind: input, shape index: {}]
  %s2 = inlined_call_operand.hbm [shape: bf16[64,128], index: 2, kind: input, shape index: {}]
  %s3 = inlined_call_operand.vmem [shape: f32[1,128], index: 3, kind: input, shape index: {}]
  %s4 = inlined_call_operand.hbm [shape: bf16[128,128], index: 4, kind: input, shape index: {}]
  %s5 = inlined_call_operand.vmem [shape: f32[1,128], index: 5, kind: input, shape index: {}]
  %s6 = inlined_call_operand.vmem [shape: f32[16,128], index: 6, kind: input, shape index: {}]
  %s7 = inlined_call_operand.hbm [shape: bf16[16,128], index: 7, kind: output, shape index: {0}]
  %s8 = inlined_call_operand.hbm [shape: f32[16,128], index: 8, kind: output, shape index: {1}]
  %9 = xla_tuple %s7, %s8
  %s10 = sld [smem:[#allocation0]]
  $region54: #{tpu_custom_call.1} parent=0
    _
  %s12 = ssub.s32 1, %s10
  %s13 = scalar_select 0, %s12, %s10
  %14 = sst [smem:[#allocation3]] %s0
  $region1: #{tpu_custom_call.1} parent=0
    #allocation4 [shape = 'u8[8192]{0}', space=vmem, size = 0x2000, scoped, tag = 'input window, operand 1, single buffered']
    #allocation5 [shape = 's32[1]{0}', space=sflag, size = 0x4, scoped, tag = 'scoped memory for tpu_custom_call.1']
    #allocation6 [shape = 's32[1]{0}', space=sflag, size = 0x4, scoped, tag = 'scoped memory for tpu_custom_call.1']
    #allocation7 [shape = 'u8[16384]{0}', space=vmem, size = 0x4000, scoped, tag = 'input window, operand 2, single buffered']
    #allocation8 [shape = 's32[1]{0}', space=sflag, size = 0x4, scoped, tag = 'scoped memory for tpu_custom_call.1']
    #allocation9 [shape = 'u8[32768]{0}', space=vmem, size = 0x8000, scoped, tag = 'input window, operand 4, single buffered']
    #allocation10 [shape = 'u8[4096]{0}', space=vmem, size = 0x1000, scoped, tag = 'output window, operand 0, single buffered']
    #allocation11 [shape = 'u8[8192]{0}', space=vmem, size = 0x2000, scoped, tag = 'output window, operand 1, single buffered']
    #allocation12 [shape = 's32[1]{0}', space=sflag, size = 0x4, scoped, tag = 'scoped memory for tpu_custom_call.1']
    %15 = vsyncpa [#allocation5], 0
    %16 = vsyncpa [#allocation8], 0
    %17 = vsyncpa [#allocation6], 0
    %18 = vsyncpa [#allocation12], 0
    // Predicated region
    $region2: #{tpu_custom_call.1} parent=1 // pred_check
      _
    $region3: #{tpu_custom_call.1} parent=1 // pred_check_branch
      %20 = sbr.rel (0) target = $region5
    $region4: #{tpu_custom_call.1} parent=1 // pred_region
      %s22 = ssub.s32 256, 256
      %23 = vsyncadd [#allocation5], %s22
      %s24 = sshll.u32 [#allocation4], 4
      %s25 = int_to_ptr.vmem [resolvable:$true] %s24
      %30 = dma.hbm_to_vmem [thread:$0]  %s1, 256, %s25, [#allocation5], 128, 128, 8
    $region5: #{tpu_custom_call.1} parent=1 // pred_fallthru
      _
    // Predicated region
    $region6: #{tpu_custom_call.1} parent=1 // pred_check
      _
    $region7: #{tpu_custom_call.1} parent=1 // pred_check_branch
      %32 = sbr.rel (0) target = $region9
    $region8: #{tpu_custom_call.1} parent=1 // pred_region
      %s34 = ssub.s32 512, 512
      %35 = vsyncadd [#allocation8], %s34
      %s36 = sshll.u32 [#allocation7], 4
      %s37 = int_to_ptr.vmem [resolvable:$true] %s36
      %42 = dma.hbm_to_vmem [thread:$0]  %s2, 512, %s37, [#allocation8], 64, 64, 4
    $region9: #{tpu_custom_call.1} parent=1 // pred_fallthru
      _
    // Predicated region
    $region10: #{tpu_custom_call.1} parent=1 // pred_check
      _
    $region11: #{tpu_custom_call.1} parent=1 // pred_check_branch
      %44 = sbr.rel (0) target = $region13
    $region12: #{tpu_custom_call.1} parent=1 // pred_region
      _
    $region13: #{tpu_custom_call.1} parent=1 // pred_fallthru
      _
    // Predicated region
    $region14: #{tpu_custom_call.1} parent=1 // pred_check
      _
    $region15: #{tpu_custom_call.1} parent=1 // pred_check_branch
      %46 = sbr.rel (0) target = $region17
    $region16: #{tpu_custom_call.1} parent=1 // pred_region
      %s48 = ssub.s32 1024, 1024
      %49 = vsyncadd [#allocation8], %s48
      %s50 = sshll.u32 [#allocation9], 4
      %s51 = int_to_ptr.vmem [resolvable:$true] %s50
      %56 = dma.hbm_to_vmem [thread:$0]  %s4, 1024, %s51, [#allocation8], 64, 64, 4
    $region17: #{tpu_custom_call.1} parent=1 // pred_fallthru
      _
    // Predicated region
    $region18: #{tpu_custom_call.1} parent=1 // pred_check
      _
    $region19: #{tpu_custom_call.1} parent=1 // pred_check_branch
      %58 = sbr.rel (0) target = $region21
    $region20: #{tpu_custom_call.1} parent=1 // pred_region
      _
    $region21: #{tpu_custom_call.1} parent=1 // pred_fallthru
      _
    // Predicated region
    $region22: #{tpu_custom_call.1} parent=1 // pred_check
      _
    $region23: #{tpu_custom_call.1} parent=1 // pred_check_branch
      %60 = sbr.rel (0) target = $region25
    $region24: #{tpu_custom_call.1} parent=1 // pred_region
      _
    $region25: #{tpu_custom_call.1} parent=1 // pred_fallthru
      _
    // Predicated region
    $region26: #{tpu_custom_call.1} parent=1 // pred_check
      _
    $region27: #{tpu_custom_call.1} parent=1 // pred_check_branch
      %62 = sbr.rel (0) target = $region29
    $region28: #{tpu_custom_call.1} parent=1 // pred_region
      %63 = dma.done [#allocation5], 256
    $region29: #{tpu_custom_call.1} parent=1 // pred_fallthru
      _
    // Predicated region
    $region30: #{tpu_custom_call.1} parent=1 // pred_check
      _
    $region31: #{tpu_custom_call.1} parent=1 // pred_check_branch
      %65 = sbr.rel (0) target = $region33
    $region32: #{tpu_custom_call.1} parent=1 // pred_region
      %66 = dma.done [#allocation8], 512
    $region33: #{tpu_custom_call.1} parent=1 // pred_fallthru
      _
    // Predicated region
    $region34: #{tpu_custom_call.1} parent=1 // pred_check
      _
    $region35: #{tpu_custom_call.1} parent=1 // pred_check_branch
      %68 = sbr.rel (0) target = $region37
    $region36: #{tpu_custom_call.1} parent=1 // pred_region
      %69 = dma.done [#allocation8], 1024
    $region37: #{tpu_custom_call.1} parent=1 // pred_fallthru
      _
    %s71 = sld [smem:[#allocation3]]
    %p72 = scmp.gt.s32.totalorder %s71, 0
    %s73 = scalar_select %p72, 0.5, 0.0
    %v74 = vld [vmem:[#allocation7] sm:$0xf]
    %v75 = vld [vmem:[#allocation7 + $0x4] sm:$0xf]
    %v76 = vld [vmem:[#allocation7 + $0x8] sm:$0xf]
    %v77 = vld [vmem:[#allocation7 + $0xc] sm:$0xf]
    %v78 = vld [vmem:[#allocation7 + $0x10] sm:$0xf]
    %v79 = vld [vmem:[#allocation7 + $0x14] sm:$0xf]
    %v80 = vld [vmem:[#allocation7 + $0x18] sm:$0xf]
    %v81 = vld [vmem:[#allocation7 + $0x1c] sm:$0xf]
    %v82 = vld [vmem:[%s3] sm:$0x1]
    %v83 = vld [vmem:[#allocation9] sm:$0xf]
    %v84 = vld [vmem:[#allocation9 + $0x4] sm:$0xf]
    %v85 = vld [vmem:[#allocation9 + $0x8] sm:$0xf]
    %v86 = vld [vmem:[#allocation9 + $0xc] sm:$0xf]
    %v87 = vld [vmem:[#allocation9 + $0x10] sm:$0xf]
    %v88 = vld [vmem:[#allocation9 + $0x14] sm:$0xf]
    %v89 = vld [vmem:[#allocation9 + $0x18] sm:$0xf]
    %v90 = vld [vmem:[#allocation9 + $0x1c] sm:$0xf]
    %v91 = vld [vmem:[#allocation9 + $0x20] sm:$0xf]
    %v92 = vld [vmem:[#allocation9 + $0x24] sm:$0xf]
    %v93 = vld [vmem:[#allocation9 + $0x28] sm:$0xf]
    %v94 = vld [vmem:[#allocation9 + $0x2c] sm:$0xf]
    %v95 = vld [vmem:[#allocation9 + $0x30] sm:$0xf]
    %v96 = vld [vmem:[#allocation9 + $0x34] sm:$0xf]
    %v97 = vld [vmem:[#allocation9 + $0x38] sm:$0xf]
    %v98 = vld [vmem:[#allocation9 + $0x3c] sm:$0xf]
    %v99 = vld [vmem:[%s5] sm:$0x1]
    %v100 = vld [vmem:[#allocation4] sm:$0xff]
    %v101 = vld [vmem:[#allocation4 + $0x8] sm:$0xff]
    %v102 = vpack.c.bf16 %v101, %v100
    %v104 = vlaneseq
    %v105 = vshrl.u32 %v104, 7
    %v106 = vsub.s32 0, %v105
    %v107 = vrot.slane %v82, %v106
    %v117 = vunpack.c.l.b16 %v74
    %v118 = vunpack.c.l.b16 %v75
    %v119 = vunpack.c.l.b16 %v76
    %v120 = vunpack.c.l.b16 %v77
    %v121 = vunpack.c.l.b16 %v78
    %v122 = vunpack.c.l.b16 %v79
    %v123 = vunpack.c.l.b16 %v80
    %v124 = vunpack.c.l.b16 %v81
    %v125 = vpack.c.b16 %v118, %v117
    %v126 = vpack.c.b16 %v120, %v119
    %v127 = vpack.c.b16 %v122, %v121
    %v128 = vpack.c.b16 %v124, %v123
    %vm133 = vcmask 523264
    %v135 = vsel %vm133, %v102, 0
    %137 = vmatprep.subr.bf16.mxu0 0
    %138 = vmatpush1.bf16.msra.mxu0 %v125
    %139 = vmatprep.subr.bf16.mxu0 0
    %140 = vmatpush1.bf16.msra.mxu0 %v126
    %141 = vmatprep.subr.bf16.mxu0 0
    %142 = vmatpush1.bf16.msra.mxu0 %v127
    %143 = vmatprep.subr.bf16.mxu0 0
    %144 = vmatpush1.bf16.msra.mxu0 %v128
    %145 = vmatprep.subr.bf16.mxu0 0
    %146 = vmatpush1.bf16.msra.mxu0 0
    %147 = vmatprep.subr.bf16.mxu0 0
    %148 = vmatpush1.bf16.msra.mxu0 0
    %149 = vmatprep.subr.bf16.mxu0 0
    %150 = vmatpush1.bf16.msra.mxu0 0
    %151 = vmatprep.subr.bf16.mxu0 0
    %152 = vmatpush1.bf16.msra.mxu0 0
    %153 = vmatprep.subr.bf16.mxu0 0
    %154 = vmatpush1.bf16.msra.mxu0 0
    %155 = vmatprep.subr.bf16.mxu0 0
    %156 = vmatpush1.bf16.msra.mxu0 0
    %157 = vmatprep.subr.bf16.mxu0 0
    %158 = vmatpush1.bf16.msra.mxu0 0
    %159 = vmatprep.subr.bf16.mxu0 0
    %160 = vmatpush1.bf16.msra.mxu0 0
    %161 = vmatprep.subr.bf16.mxu0 0
    %162 = vmatpush1.bf16.msra.mxu0 0
    %163 = vmatprep.subr.bf16.mxu0 0
    %164 = vmatpush1.bf16.msra.mxu0 0
    %165 = vmatprep.subr.bf16.mxu0 0
    %166 = vmatpush1.bf16.msra.mxu0 0
    %167 = vmatprep.subr.bf16.mxu0 0
    %168 = vmatpush1.bf16.msra.mxu0 0
    %169 = vmatprep.mubr.bf16.mxu0 0
    %170 = vmatmul.mubr.bf16.gmra.mrb[0].mxu0 %v135
    %v171 = vpop.f32.mrb[0].mxu0
    %v172 = vadd.f32 %v107, %v171
    %v173 = vpop.f32.mrb[0].mxu0
    %v174 = vpop.f32.mrb[0].mxu0
    %v175 = vadd.f32 %v107, %v174
    %v176 = vpop.f32.mrb[0].mxu0
    %177 = vdwg.mxu0
    %v178 = vld [vmem:[%s6] sm:$0xff]
    %v179 = vld [vmem:[%s6 + $0x8] sm:$0xff]
    %v180 = vstv %s73
    %v181 = vmul.f32 %v180, %v178
    %v182 = vmul.f32 %v180, %v179
    %v183 = vadd.f32 %v181, %v172
    %v184 = vadd.f32 %v182, %v175
    %vm185 = vcmp.gt.f32.partialorder %v183, 0.5
    %vm186 = vcmp.gt.f32.partialorder %v184, 0.5
    %v187 = vsel %vm185, 1, 0
    %v188 = vsel %vm186, 1, 0
    %v189 = vcvt.s32.f32 %v187
    %v190 = vcvt.s32.f32 %v188
    %v191 = vpack.c.bf16 %v190, %v189
    %v193 = vlaneseq
    %v194 = vshrl.u32 %v193, 7
    %v195 = vsub.s32 0, %v194
    %v196 = vrot.slane %v99, %v195
    %v214 = vunpack.c.l.b16 %v83
    %v215 = vunpack.c.l.b16 %v84
    %v216 = vunpack.c.l.b16 %v85
    %v217 = vunpack.c.l.b16 %v86
    %v218 = vunpack.c.l.b16 %v87
    %v219 = vunpack.c.l.b16 %v88
    %v220 = vunpack.c.l.b16 %v89
    %v221 = vunpack.c.l.b16 %v90
    %v222 = vunpack.c.l.b16 %v91
    %v223 = vunpack.c.l.b16 %v92
    %v224 = vunpack.c.l.b16 %v93
    %v225 = vunpack.c.l.b16 %v94
    %v226 = vunpack.c.l.b16 %v95
    %v227 = vunpack.c.l.b16 %v96
    %v228 = vunpack.c.l.b16 %v97
    %v229 = vunpack.c.l.b16 %v98
    %v230 = vpack.c.b16 %v215, %v214
    %v231 = vpack.c.b16 %v217, %v216
    %v232 = vpack.c.b16 %v219, %v218
    %v233 = vpack.c.b16 %v221, %v220
    %v234 = vpack.c.b16 %v223, %v222
    %v235 = vpack.c.b16 %v225, %v224
    %v236 = vpack.c.b16 %v227, %v226
    %v237 = vpack.c.b16 %v229, %v228
    %246 = vmatprep.subr.bf16.mxu0 0
    %247 = vmatpush1.bf16.msra.mxu0 %v230
    %248 = vmatprep.subr.bf16.mxu0 0
    %249 = vmatpush1.bf16.msra.mxu0 %v231
    %250 = vmatprep.subr.bf16.mxu0 0
    %251 = vmatpush1.bf16.msra.mxu0 %v232
    %252 = vmatprep.subr.bf16.mxu0 0
    %253 = vmatpush1.bf16.msra.mxu0 %v233
    %254 = vmatprep.subr.bf16.mxu0 0
    %255 = vmatpush1.bf16.msra.mxu0 %v234
    %256 = vmatprep.subr.bf16.mxu0 0
    %257 = vmatpush1.bf16.msra.mxu0 %v235
    %258 = vmatprep.subr.bf16.mxu0 0
    %259 = vmatpush1.bf16.msra.mxu0 %v236
    %260 = vmatprep.subr.bf16.mxu0 0
    %261 = vmatpush1.bf16.msra.mxu0 %v237
    %262 = vmatprep.subr.bf16.mxu0 0
    %263 = vmatpush1.bf16.msra.mxu0 0
    %264 = vmatprep.subr.bf16.mxu0 0
    %265 = vmatpush1.bf16.msra.mxu0 0
    %266 = vmatprep.subr.bf16.mxu0 0
    %267 = vmatpush1.bf16.msra.mxu0 0
    %268 = vmatprep.subr.bf16.mxu0 0
    %269 = vmatpush1.bf16.msra.mxu0 0
    %270 = vmatprep.subr.bf16.mxu0 0
    %271 = vmatpush1.bf16.msra.mxu0 0
    %272 = vmatprep.subr.bf16.mxu0 0
    %273 = vmatpush1.bf16.msra.mxu0 0
    %274 = vmatprep.subr.bf16.mxu0 0
    %275 = vmatpush1.bf16.msra.mxu0 0
    %276 = vmatprep.subr.bf16.mxu0 0
    %277 = vmatpush1.bf16.msra.mxu0 0
    %278 = vmatprep.mubr.bf16.mxu0 0
    %279 = vmatmul.mubr.bf16.gmra.mrb[0].mxu0 %v191
    %v280 = vpop.f32.mrb[0].mxu0
    %v281 = vadd.f32 %v196, %v280
    %v282 = vpop.f32.mrb[0].mxu0
    %v283 = vpop.f32.mrb[0].mxu0
    %v284 = vadd.f32 %v196, %v283
    %v285 = vpop.f32.mrb[0].mxu0
    %286 = vdwg.mxu0
    %v287 = vadd.f32 %v183, %v281
    %v288 = vadd.f32 %v184, %v284
    %vm289 = vcmp.gt.f32.partialorder %v287, 0.5
    %vm290 = vcmp.gt.f32.partialorder %v288, 0.5
    %v291 = vsel %vm289, 1, 0
    %v292 = vsel %vm290, 1, 0
    %v293 = vcvt.s32.f32 %v291
    %v294 = vcvt.s32.f32 %v292
    %v295 = vpack.c.bf16 %v294, %v293
    %v297 = vunpack.c.l.b16 %v295
    %v298 = vunpack.c.h.b16 %v295
    %v299 = vpack.c.b16 %v297, %v297
    %v300 = vpack.c.b16 %v298, %v298
    %303 = vst [vmem:[#allocation10] sm:$0xf] %v299
    %304 = vst [vmem:[#allocation10 + $0x4] sm:$0xf] %v300
    %v305 = vsel %vm289, 0.0, %v287
    %v306 = vsel %vm290, 0.0, %v288
    %307 = vst [vmem:[#allocation11] sm:$0xff] %v305
    %308 = vst [vmem:[#allocation11 + $0x8] sm:$0xff] %v306
    // Predicated region
    $region38: #{tpu_custom_call.1} parent=1 // pred_check
      _
    $region39: #{tpu_custom_call.1} parent=1 // pred_check_branch
      %310 = sbr.rel (0) target = $region41
    $region40: #{tpu_custom_call.1} parent=1 // pred_region
      %s312 = ssub.s32 128, 128
      %313 = vsyncadd [#allocation6], %s312
      %s314 = sshll.u32 [#allocation10], 4
      %s315 = int_to_ptr.vmem [resolvable:$true] %s314
      %320 = dma.vmem_to_hbm [thread:$0]  %s315, 128, %s7, [#allocation6], 64, 64, 4
    $region41: #{tpu_custom_call.1} parent=1 // pred_fallthru
      _
    // Predicated region
    $region42: #{tpu_custom_call.1} parent=1 // pred_check
      _
    $region43: #{tpu_custom_call.1} parent=1 // pred_check_branch
      %322 = sbr.rel (0) target = $region45
    $region44: #{tpu_custom_call.1} parent=1 // pred_region
      %s324 = ssub.s32 256, 256
      %325 = vsyncadd [#allocation12], %s324
      %s326 = sshll.u32 [#allocation11], 4
      %s327 = int_to_ptr.vmem [resolvable:$true] %s326
      %332 = dma.vmem_to_hbm [thread:$0]  %s327, 256, %s8, [#allocation12], 128, 128, 8
    $region45: #{tpu_custom_call.1} parent=1 // pred_fallthru
      _
    // Predicated region
    $region46: #{tpu_custom_call.1} parent=1 // pred_check
      _
    $region47: #{tpu_custom_call.1} parent=1 // pred_check_branch
      %334 = sbr.rel (0) target = $region49
    $region48: #{tpu_custom_call.1} parent=1 // pred_region
      %335 = dma.done [#allocation6], 128
    $region49: #{tpu_custom_call.1} parent=1 // pred_fallthru
      _
    // Predicated region
    $region50: #{tpu_custom_call.1} parent=1 // pred_check
      _
    $region51: #{tpu_custom_call.1} parent=1 // pred_check_branch
      %337 = sbr.rel (0) target = $region53
    $region52: #{tpu_custom_call.1} parent=1 // pred_region
      %338 = dma.done [#allocation12], 256
    $region53: #{tpu_custom_call.1} parent=1 // pred_fallthru
      _
    %339 = vsyncpa [#allocation5], 1
    %340 = vsyncpa [#allocation8], 1
    %341 = vsyncpa [#allocation6], 1
    %342 = vsyncpa [#allocation12], 1

</llo_original>
